<compile_context>
chip_gen: v7x
topology: tpu7x:2x2x1
jax: 0.10.0
libtpu: 0.0.40
codegen_flags: <defaults>
</compile_context>

<pallas_src>
import jax
import jax.numpy as jnp
from jax.experimental import pallas as pl
from jax.experimental.pallas import tpu as pltpu

NUM_CLASSES = 4      # stand-in for len(set(y)) from the CSV labels
OUT_PAD = 128        # lane-dense padded logit width (multiple of 128)
IN_FEATURES = 25
MAX_TILE_B = 1024    # batch tile for large-B streaming (fits easily in VMEM)


def _mlp_kernel(x_ref,
                w1_ref, b1_ref,
                w2_ref, b2_ref,
                w3_ref, b3_ref,
                w4_ref, b4_ref,
                o_ref):
    """One batch tile of the full 4-layer MLP (weights resident in VMEM)."""
    x = x_ref[...]  # (TILE_B, 25) f32

    def layer(h, w_ref, b_ref, relu):
        # bf16 operands feed the MXU; accumulation + bias/ReLU stay in f32
        # (v5e has no bf16 VPU/EUP, so elementwise math is kept f32).
        acc = jnp.dot(h.astype(w_ref.dtype), w_ref[...],
                      preferred_element_type=jnp.float32)
        acc = acc + b_ref[...]
        return jnp.maximum(acc, 0.0) if relu else acc

    h1 = layer(x,  w1_ref, b1_ref, relu=True)        # (TILE_B, 200)
    # dropout1: identity in eval mode
    h2 = layer(h1, w2_ref, b2_ref, relu=True)        # (TILE_B, 100)
    # dropout2: identity in eval mode
    h3 = layer(h2, w3_ref, b3_ref, relu=True)        # (TILE_B, 50)
    logits = layer(h3, w4_ref, b4_ref, relu=False)   # (TILE_B, OUT_PAD)

    o_ref[...] = logits.astype(o_ref.dtype)


def _round_up(x, m):
    return (x + m - 1) // m * m


def questionnaire_nn_forward(x, params):
    """x: [B, 25] float32.  Returns [B, NUM_CLASSES] float32 logits."""
    B = x.shape[0]
    w1, b1 = params["w1"], params["b1"]
    w2, b2 = params["w2"], params["b2"]
    w3, b3 = params["w3"], params["b3"]
    w4, b4 = params["w4"], params["b4"]

    # Batch tiling: sublane-aligned (multiple of 8) tile; single tile for
    # small B, streamed MAX_TILE_B-row tiles for large B.
    if B <= MAX_TILE_B:
        b_pad = _round_up(B, 8)
        tile_b = b_pad
    else:
        tile_b = MAX_TILE_B
        b_pad = _round_up(B, tile_b)
    if b_pad != B:
        x = jnp.pad(x, ((0, b_pad - B), (0, 0)))
    grid = (b_pad // tile_b,)

    def resident(a):
        # Whole-array block pinned at block (0, 0) => parameter stays in VMEM
        # for every batch tile; only activations move per grid step.
        return pl.BlockSpec(a.shape, lambda i: (0, 0))

    flops = 2 * b_pad * (IN_FEATURES * 200 + 200 * 100 + 100 * 50 + 50 * OUT_PAD)
    param_bytes = sum(int(p.size) * p.dtype.itemsize
                      for p in (w1, b1, w2, b2, w3, b3, w4, b4))
    bytes_accessed = b_pad * IN_FEATURES * 4 + b_pad * OUT_PAD * 4 + param_bytes

    out = pl.pallas_call(
        _mlp_kernel,
        out_shape=jax.ShapeDtypeStruct((b_pad, OUT_PAD), jnp.float32),
        grid=grid,
        in_specs=[pl.BlockSpec((tile_b, IN_FEATURES), lambda i: (i, 0)),
                  resident(w1), resident(b1),
                  resident(w2), resident(b2),
                  resident(w3), resident(b3),
                  resident(w4), resident(b4)],
        out_specs=pl.BlockSpec((tile_b, OUT_PAD), lambda i: (i, 0)),
        compiler_params=pltpu.CompilerParams(
            dimension_semantics=("parallel",)),
        cost_estimate=pl.CostEstimate(flops=flops,
                                      transcendentals=0,
                                      bytes_accessed=bytes_accessed),
    )(x, w1, b1, w2, b2, w3, b3, w4, b4)

    return out[:B, :NUM_CLASSES]


def init_params(key, weight_dtype=jnp.bfloat16):
    """Parameter init matching torch nn.Linear (U(-1/sqrt(in), 1/sqrt(in))).

    Weights are stored transposed vs torch, i.e. (in, out) so the kernel
    computes x @ W + b.  Weights in bf16, biases in f32.  The final layer is
    zero-padded along the class dim to OUT_PAD for a lane-dense output store.
    """
    dims = [(IN_FEATURES, 200), (200, 100), (100, 50), (50, NUM_CLASSES)]
    params = {}
    keys = jax.random.split(key, 2 * len(dims))
    for i, (fin, fout) in enumerate(dims):
        bound = 1.0 / (fin ** 0.5)
        w = jax.random.uniform(keys[2 * i], (fin, fout), jnp.float32,
                               minval=-bound, maxval=bound)
        b = jax.random.uniform(keys[2 * i + 1], (1, fout), jnp.float32,
                               minval=-bound, maxval=bound)
        if i == len(dims) - 1:
            w = jnp.pad(w, ((0, 0), (0, OUT_PAD - fout)))
            b = jnp.pad(b, ((0, 0), (0, OUT_PAD - fout)))
        params[f"w{i + 1}"] = w.astype(weight_dtype)
        params[f"b{i + 1}"] = b  # biases stay f32 (added post-accumulation)
    return params


def reference_forward(x, params):
    """Pure-JAX reference with identical bf16-weight / f32-accumulate math."""
    def layer(h, w, b, relu):
        acc = jnp.dot(h.astype(w.dtype), w,
                      preferred_element_type=jnp.float32) + b
        return jnp.maximum(acc, 0.0) if relu else acc

    h = layer(x, params["w1"], params["b1"], True)
    h = layer(h, params["w2"], params["b2"], True)
    h = layer(h, params["w3"], params["b3"], True)
    return layer(h, params["w4"], params["b4"], False)[:, :NUM_CLASSES]


if __name__ == "__main__":
    key = jax.random.PRNGKey(0)
    k_x, k_p = jax.random.split(key)

    B = 8
    x = jax.random.normal(k_x, (B, IN_FEATURES), dtype=jnp.float32)
    params = init_params(k_p)

    out = questionnaire_nn_forward(x, params)
    out = jax.block_until_ready(out)

    ref = reference_forward(x, params)
    assert out.shape == (B, NUM_CLASSES), out.shape
    assert jnp.allclose(out, ref, atol=5e-3, rtol=5e-3), (
        float(jnp.max(jnp.abs(out - ref))))

    print("KERNEL_OK")
</pallas_src>

<mosaic_0001>
module attributes {stable_mosaic.version = 11 : i64} {
  func.func @_mlp_kernel(%arg0: i32, %arg1: memref<8x25xf32, #tpu.memory_space<vmem>>, %arg2: memref<25x200xbf16, #tpu.memory_space<vmem>>, %arg3: memref<1x200xf32, #tpu.memory_space<vmem>>, %arg4: memref<200x100xbf16, #tpu.memory_space<vmem>>, %arg5: memref<1x100xf32, #tpu.memory_space<vmem>>, %arg6: memref<100x50xbf16, #tpu.memory_space<vmem>>, %arg7: memref<1x50xf32, #tpu.memory_space<vmem>>, %arg8: memref<50x128xbf16, #tpu.memory_space<vmem>>, %arg9: memref<1x128xf32, #tpu.memory_space<vmem>>, %arg10: memref<8x128xf32, #tpu.memory_space<vmem>>) attributes {dimension_semantics = [#tpu.dimension_semantics<parallel>], iteration_bounds = array<i64: 1>, scalar_prefetch = 0 : i64, scratch_operands = 0 : i64, tpu.core_type = #tpu.core_type<tc>, window_params = [{transform_indices = @transform_0, window_bounds = array<i64: 8, 25>}, {pipeline_mode = #tpu.pipeline_mode<synchronous>, transform_indices = @transform_1, window_bounds = array<i64: 25, 200>}, {pipeline_mode = #tpu.pipeline_mode<synchronous>, transform_indices = @transform_2, window_bounds = array<i64: 1, 200>}, {pipeline_mode = #tpu.pipeline_mode<synchronous>, transform_indices = @transform_3, window_bounds = array<i64: 200, 100>}, {pipeline_mode = #tpu.pipeline_mode<synchronous>, transform_indices = @transform_4, window_bounds = array<i64: 1, 100>}, {pipeline_mode = #tpu.pipeline_mode<synchronous>, transform_indices = @transform_5, window_bounds = array<i64: 100, 50>}, {pipeline_mode = #tpu.pipeline_mode<synchronous>, transform_indices = @transform_6, window_bounds = array<i64: 1, 50>}, {pipeline_mode = #tpu.pipeline_mode<synchronous>, transform_indices = @transform_7, window_bounds = array<i64: 50, 128>}, {pipeline_mode = #tpu.pipeline_mode<synchronous>, transform_indices = @transform_8, window_bounds = array<i64: 1, 128>}, {transform_indices = @transform_9, window_bounds = array<i64: 8, 128>}]} {
    %c0 = arith.constant 0 : index
    %c0_0 = arith.constant 0 : index
    %0 = vector.load %arg1[%c0, %c0_0] : memref<8x25xf32, #tpu.memory_space<vmem>>, vector<8x25xf32>
    %1 = arith.truncf %0 : vector<8x25xf32> to vector<8x25xbf16>
    %c0_1 = arith.constant 0 : index
    %c0_2 = arith.constant 0 : index
    %2 = vector.load %arg2[%c0_1, %c0_2] : memref<25x200xbf16, #tpu.memory_space<vmem>>, vector<25x200xbf16>
    %cst = arith.constant dense<0.000000e+00> : vector<8x200xf32>
    %3 = tpu.matmul %1, %2, %cst {dimension_numbers = #tpu.dot_dimension_numbers<[1], [0], [0], [1], [0, 0, 1, 1], [], []>} : vector<8x25xbf16>, vector<25x200xbf16>, vector<8x200xf32> -> vector<8x200xf32>
    %c0_3 = arith.constant 0 : index
    %c0_4 = arith.constant 0 : index
    %4 = vector.load %arg3[%c0_3, %c0_4] : memref<1x200xf32, #tpu.memory_space<vmem>>, vector<1x200xf32>
    %5 = vector.broadcast %4 : vector<1x200xf32> to vector<8x200xf32>
    %6 = arith.addf %3, %5 : vector<8x200xf32>
    %cst_5 = arith.constant 0.000000e+00 : f32
    %7 = vector.broadcast %cst_5 : f32 to vector<8x200xf32>
    %8 = arith.maximumf %6, %7 : vector<8x200xf32>
    %9 = arith.truncf %8 : vector<8x200xf32> to vector<8x200xbf16>
    %c0_6 = arith.constant 0 : index
    %c0_7 = arith.constant 0 : index
    %10 = vector.load %arg4[%c0_6, %c0_7] : memref<200x100xbf16, #tpu.memory_space<vmem>>, vector<200x100xbf16>
    %cst_8 = arith.constant dense<0.000000e+00> : vector<8x100xf32>
    %11 = tpu.matmul %9, %10, %cst_8 {dimension_numbers = #tpu.dot_dimension_numbers<[1], [0], [0], [1], [0, 0, 1, 1], [], []>} : vector<8x200xbf16>, vector<200x100xbf16>, vector<8x100xf32> -> vector<8x100xf32>
    %c0_9 = arith.constant 0 : index
    %c0_10 = arith.constant 0 : index
    %12 = vector.load %arg5[%c0_9, %c0_10] : memref<1x100xf32, #tpu.memory_space<vmem>>, vector<1x100xf32>
    %13 = vector.broadcast %12 : vector<1x100xf32> to vector<8x100xf32>
    %14 = arith.addf %11, %13 : vector<8x100xf32>
    %cst_11 = arith.constant 0.000000e+00 : f32
    %15 = vector.broadcast %cst_11 : f32 to vector<8x100xf32>
    %16 = arith.maximumf %14, %15 : vector<8x100xf32>
    %17 = arith.truncf %16 : vector<8x100xf32> to vector<8x100xbf16>
    %c0_12 = arith.constant 0 : index
    %c0_13 = arith.constant 0 : index
    %18 = vector.load %arg6[%c0_12, %c0_13] : memref<100x50xbf16, #tpu.memory_space<vmem>>, vector<100x50xbf16>
    %cst_14 = arith.constant dense<0.000000e+00> : vector<8x50xf32>
    %19 = tpu.matmul %17, %18, %cst_14 {dimension_numbers = #tpu.dot_dimension_numbers<[1], [0], [0], [1], [0, 0, 1, 1], [], []>} : vector<8x100xbf16>, vector<100x50xbf16>, vector<8x50xf32> -> vector<8x50xf32>
    %c0_15 = arith.constant 0 : index
    %c0_16 = arith.constant 0 : index
    %20 = vector.load %arg7[%c0_15, %c0_16] : memref<1x50xf32, #tpu.memory_space<vmem>>, vector<1x50xf32>
    %21 = vector.broadcast %20 : vector<1x50xf32> to vector<8x50xf32>
    %22 = arith.addf %19, %21 : vector<8x50xf32>
    %cst_17 = arith.constant 0.000000e+00 : f32
    %23 = vector.broadcast %cst_17 : f32 to vector<8x50xf32>
    %24 = arith.maximumf %22, %23 : vector<8x50xf32>
    %25 = arith.truncf %24 : vector<8x50xf32> to vector<8x50xbf16>
    %c0_18 = arith.constant 0 : index
    %c0_19 = arith.constant 0 : index
    %26 = vector.load %arg8[%c0_18, %c0_19] : memref<50x128xbf16, #tpu.memory_space<vmem>>, vector<50x128xbf16>
    %cst_20 = arith.constant dense<0.000000e+00> : vector<8x128xf32>
    %27 = tpu.matmul %25, %26, %cst_20 {dimension_numbers = #tpu.dot_dimension_numbers<[1], [0], [0], [1], [0, 0, 1, 1], [], []>} : vector<8x50xbf16>, vector<50x128xbf16>, vector<8x128xf32> -> vector<8x128xf32>
    %c0_21 = arith.constant 0 : index
    %c0_22 = arith.constant 0 : index
    %28 = vector.load %arg9[%c0_21, %c0_22] : memref<1x128xf32, #tpu.memory_space<vmem>>, vector<1x128xf32>
    %29 = vector.broadcast %28 : vector<1x128xf32> to vector<8x128xf32>
    %30 = arith.addf %27, %29 : vector<8x128xf32>
    %c0_23 = arith.constant 0 : index
    %c0_24 = arith.constant 0 : index
    %31 = vector.load %arg10[%c0_23, %c0_24] : memref<8x128xf32, #tpu.memory_space<vmem>>, vector<8x128xf32>
    tpu.vector_store %arg10[%c0_23, %c0_24], %30 {strides = array<i32>} : memref<8x128xf32, #tpu.memory_space<vmem>>, vector<8x128xf32>,
    return
  }
  func.func @transform_0(%arg0: i32) -> (i32, i32) {
    %c0_i32 = arith.constant 0 : i32
    %c0_i32_0 = arith.constant 0 : i32
    return %arg0, %c0_i32 : i32, i32
  }
  func.func @transform_1(%arg0: i32) -> (i32, i32) {
    %c0_i32 = arith.constant 0 : i32
    %c0_i32_0 = arith.constant 0 : i32
    %c0_i32_1 = arith.constant 0 : i32
    return %c0_i32, %c0_i32_0 : i32, i32
  }
  func.func @transform_2(%arg0: i32) -> (i32, i32) {
    %c0_i32 = arith.constant 0 : i32
    %c0_i32_0 = arith.constant 0 : i32
    %c0_i32_1 = arith.constant 0 : i32
    return %c0_i32, %c0_i32_0 : i32, i32
  }
  func.func @transform_3(%arg0: i32) -> (i32, i32) {
    %c0_i32 = arith.constant 0 : i32
    %c0_i32_0 = arith.constant 0 : i32
    %c0_i32_1 = arith.constant 0 : i32
    return %c0_i32, %c0_i32_0 : i32, i32
  }
  func.func @transform_4(%arg0: i32) -> (i32, i32) {
    %c0_i32 = arith.constant 0 : i32
    %c0_i32_0 = arith.constant 0 : i32
    %c0_i32_1 = arith.constant 0 : i32
    return %c0_i32, %c0_i32_0 : i32, i32
  }
  func.func @transform_5(%arg0: i32) -> (i32, i32) {
    %c0_i32 = arith.constant 0 : i32
    %c0_i32_0 = arith.constant 0 : i32
    %c0_i32_1 = arith.constant 0 : i32
    return %c0_i32, %c0_i32_0 : i32, i32
  }
  func.func @transform_6(%arg0: i32) -> (i32, i32) {
    %c0_i32 = arith.constant 0 : i32
    %c0_i32_0 = arith.constant 0 : i32
    %c0_i32_1 = arith.constant 0 : i32
    return %c0_i32, %c0_i32_0 : i32, i32
  }
  func.func @transform_7(%arg0: i32) -> (i32, i32) {
    %c0_i32 = arith.constant 0 : i32
    %c0_i32_0 = arith.constant 0 : i32
    %c0_i32_1 = arith.constant 0 : i32
    return %c0_i32, %c0_i32_0 : i32, i32
  }
  func.func @transform_8(%arg0: i32) -> (i32, i32) {
    %c0_i32 = arith.constant 0 : i32
    %c0_i32_0 = arith.constant 0 : i32
    %c0_i32_1 = arith.constant 0 : i32
    return %c0_i32, %c0_i32_0 : i32, i32
  }
  func.func @transform_9(%arg0: i32) -> (i32, i32) {
    %c0_i32 = arith.constant 0 : i32
    %c0_i32_0 = arith.constant 0 : i32
    return %arg0, %c0_i32 : i32, i32
  }
}

</mosaic_0001>

<llo_original>
// kernel: tpu_custom_call.1
$region0: #{tpu_custom_call.1}
  #allocation0 [shape = 'u32[]', space=smem, size = 0x4, offset = 0x4, fixed_abs, tag = 'smem constant byte address 0x4 - core index']
  #allocation1 [shape = 'u32[144,128]{1,0:T(1,128)}', space=vmem, size = 0x12000, scoped, tag = 'internal scratch']
  %s0 = inlined_call_operand.vmem [shape: f32[8,25], index: 0, kind: input, shape index: {}]
  %s1 = inlined_call_operand.vmem [shape: bf16[25,200], index: 1, kind: input, shape index: {}]
  %s2 = inlined_call_operand.vmem [shape: f32[1,200], index: 2, kind: input, shape index: {}]
  %s3 = inlined_call_operand.hbm [shape: bf16[200,100], index: 3, kind: input, shape index: {}]
  %s4 = inlined_call_operand.vmem [shape: f32[1,100], index: 4, kind: input, shape index: {}]
  %s5 = inlined_call_operand.vmem [shape: bf16[100,50], index: 5, kind: input, shape index: {}]
  %s6 = inlined_call_operand.vmem [shape: f32[1,50], index: 6, kind: input, shape index: {}]
  %s7 = inlined_call_operand.vmem [shape: bf16[50,128], index: 7, kind: input, shape index: {}]
  %s8 = inlined_call_operand.vmem [shape: f32[1,128], index: 8, kind: input, shape index: {}]
  %s9 = inlined_call_operand.hbm [shape: f32[8,128], index: 9, kind: output, shape index: {}]
  %s10 = sld [smem:[#allocation0]]
  $region50: #{tpu_custom_call.1} parent=0
    _
  %s12 = ssub.s32 1, %s10
  %s13 = scalar_select 0, %s12, %s10
  $region1: #{tpu_custom_call.1} parent=0
    #allocation2 [shape = 'u8[51200]{0}', space=vmem, size = 0xc800, scoped, tag = 'input window, operand 3, single buffered']
    #allocation3 [shape = 's32[1]{0}', space=sflag, size = 0x4, scoped, tag = 'scoped memory for tpu_custom_call.1']
    #allocation4 [shape = 's32[1]{0}', space=sflag, size = 0x4, scoped, tag = 'scoped memory for tpu_custom_call.1']
    #allocation5 [shape = 'u8[4096]{0}', space=vmem, size = 0x1000, scoped, tag = 'output window, operand 0, single buffered']
    %14 = vsyncpa [#allocation3], 0
    %15 = vsyncpa [#allocation4], 0
    // Predicated region
    $region2: #{tpu_custom_call.1} parent=1 // pred_check
      _
    $region3: #{tpu_custom_call.1} parent=1 // pred_check_branch
      %17 = sbr.rel (0) target = $region5
    $region4: #{tpu_custom_call.1} parent=1 // pred_region
      _
    $region5: #{tpu_custom_call.1} parent=1 // pred_fallthru
      _
    // Predicated region
    $region6: #{tpu_custom_call.1} parent=1 // pred_check
      _
    $region7: #{tpu_custom_call.1} parent=1 // pred_check_branch
      %19 = sbr.rel (0) target = $region9
    $region8: #{tpu_custom_call.1} parent=1 // pred_region
      _
    $region9: #{tpu_custom_call.1} parent=1 // pred_fallthru
      _
    // Predicated region
    $region10: #{tpu_custom_call.1} parent=1 // pred_check
      _
    $region11: #{tpu_custom_call.1} parent=1 // pred_check_branch
      %21 = sbr.rel (0) target = $region13
    $region12: #{tpu_custom_call.1} parent=1 // pred_region
      _
    $region13: #{tpu_custom_call.1} parent=1 // pred_fallthru
      _
    // Predicated region
    $region14: #{tpu_custom_call.1} parent=1 // pred_check
      _
    $region15: #{tpu_custom_call.1} parent=1 // pred_check_branch
      %23 = sbr.rel (0) target = $region17
    $region16: #{tpu_custom_call.1} parent=1 // pred_region
      %s25 = ssub.s32 1600, 1600
      %26 = vsyncadd [#allocation3], %s25
      %s27 = sshll.u32 [#allocation2], 4
      %s28 = int_to_ptr.vmem [resolvable:$true] %s27
      %33 = dma.hbm_to_vmem [thread:$0]  %s3, 1600, %s28, [#allocation3], 64, 64, 4
    $region17: #{tpu_custom_call.1} parent=1 // pred_fallthru
      _
    // Predicated region
    $region18: #{tpu_custom_call.1} parent=1 // pred_check
      _
    $region19: #{tpu_custom_call.1} parent=1 // pred_check_branch
      %35 = sbr.rel (0) target = $region21
    $region20: #{tpu_custom_call.1} parent=1 // pred_region
      _
    $region21: #{tpu_custom_call.1} parent=1 // pred_fallthru
      _
    // Predicated region
    $region22: #{tpu_custom_call.1} parent=1 // pred_check
      _
    $region23: #{tpu_custom_call.1} parent=1 // pred_check_branch
      %37 = sbr.rel (0) target = $region25
    $region24: #{tpu_custom_call.1} parent=1 // pred_region
      _
    $region25: #{tpu_custom_call.1} parent=1 // pred_fallthru
      _
    // Predicated region
    $region26: #{tpu_custom_call.1} parent=1 // pred_check
      _
    $region27: #{tpu_custom_call.1} parent=1 // pred_check_branch
      %39 = sbr.rel (0) target = $region29
    $region28: #{tpu_custom_call.1} parent=1 // pred_region
      _
    $region29: #{tpu_custom_call.1} parent=1 // pred_fallthru
      _
    // Predicated region
    $region30: #{tpu_custom_call.1} parent=1 // pred_check
      _
    $region31: #{tpu_custom_call.1} parent=1 // pred_check_branch
      %41 = sbr.rel (0) target = $region33
    $region32: #{tpu_custom_call.1} parent=1 // pred_region
      _
    $region33: #{tpu_custom_call.1} parent=1 // pred_fallthru
      _
    // Predicated region
    $region34: #{tpu_custom_call.1} parent=1 // pred_check
      _
    $region35: #{tpu_custom_call.1} parent=1 // pred_check_branch
      %43 = sbr.rel (0) target = $region37
    $region36: #{tpu_custom_call.1} parent=1 // pred_region
      _
    $region37: #{tpu_custom_call.1} parent=1 // pred_fallthru
      _
    // Predicated region
    $region38: #{tpu_custom_call.1} parent=1 // pred_check
      _
    $region39: #{tpu_custom_call.1} parent=1 // pred_check_branch
      %45 = sbr.rel (0) target = $region41
    $region40: #{tpu_custom_call.1} parent=1 // pred_region
      %46 = dma.done [#allocation3], 1600
    $region41: #{tpu_custom_call.1} parent=1 // pred_fallthru
      _
    %v48 = vld [vmem:[%s0] sm:$0xff]
    %v49 = vpack.c.bf16 %v48, %v48
    %v50 = vld [vmem:[%s1] sm:$0xff]
    %v51 = vld [vmem:[%s1 + $0x8] sm:$0xff]
    %v52 = vld [vmem:[%s1 + $0x10] sm:$0xff]
    %v53 = vld [vmem:[%s1 + $0x18] sm:$0x11]
    %v54 = vld [vmem:[%s2] sm:$0x3]
    %v56 = vlaneseq
    %v57 = vshrl.u32 %v56, 7
    %v58 = vsub.s32 0, %v57
    %v59 = vrot.slane %v54, %v58
    %v60 = vlaneseq
    %v61 = vshrl.u32 %v60, 7
    %v62 = vsub.s32 1, %v61
    %v63 = vrot.slane %v54, %v62
    %v70 = vunpack.c.l.b16 %v50
    %v71 = vunpack.c.h.b16 %v50
    %v72 = vunpack.c.l.b16 %v51
    %v73 = vunpack.c.h.b16 %v51
    %v74 = vunpack.c.l.b16 %v52
    %v75 = vunpack.c.h.b16 %v52
    %v76 = vunpack.c.l.b16 %v53
    %v77 = vunpack.c.h.b16 %v53
    %v78 = vpack.c.b16 %v72, %v70
    %v79 = vpack.c.b16 %v73, %v71
    %v80 = vpack.c.b16 %v76, %v74
    %v81 = vpack.c.b16 %v77, %v75
    %vm84 = vcmask 203776
    %v86 = vsel %vm84, %v49, 0
    %vm88 = vcmask 1043456
    %vm89 = vcmask 1044480
    %v90 = vsel %vm88, 4294967295, 65535
    %v91 = vsel %vm89, %v90, 0
    %v93 = vand.u32 %v80, %v91
    %v96 = vand.u32 %v81, %v91
    %98 = vmatprep.subr.bf16.mxu0 %v79
    %99 = vmatpush1.bf16.msra.mxu0 %v78
    %100 = vmatprep.subr.bf16.mxu0 %v96
    %101 = vmatpush1.bf16.msra.mxu0 %v93
    %102 = vmatprep.subr.bf16.mxu0 0
    %103 = vmatpush1.bf16.msra.mxu0 0
    %104 = vmatprep.subr.bf16.mxu0 0
    %105 = vmatpush1.bf16.msra.mxu0 0
    %106 = vmatprep.subr.bf16.mxu0 0
    %107 = vmatpush1.bf16.msra.mxu0 0
    %108 = vmatprep.subr.bf16.mxu0 0
    %109 = vmatpush1.bf16.msra.mxu0 0
    %110 = vmatprep.subr.bf16.mxu0 0
    %111 = vmatpush1.bf16.msra.mxu0 0
    %112 = vmatprep.subr.bf16.mxu0 0
    %113 = vmatpush1.bf16.msra.mxu0 0
    %114 = vmatprep.subr.bf16.mxu0 0
    %115 = vmatpush1.bf16.msra.mxu0 0
    %116 = vmatprep.subr.bf16.mxu0 0
    %117 = vmatpush1.bf16.msra.mxu0 0
    %118 = vmatprep.subr.bf16.mxu0 0
    %119 = vmatpush1.bf16.msra.mxu0 0
    %120 = vmatprep.subr.bf16.mxu0 0
    %121 = vmatpush1.bf16.msra.mxu0 0
    %122 = vmatprep.subr.bf16.mxu0 0
    %123 = vmatpush1.bf16.msra.mxu0 0
    %124 = vmatprep.subr.bf16.mxu0 0
    %125 = vmatpush1.bf16.msra.mxu0 0
    %126 = vmatprep.subr.bf16.mxu0 0
    %127 = vmatpush1.bf16.msra.mxu0 0
    %128 = vmatprep.subr.bf16.mxu0 0
    %129 = vmatpush1.bf16.msra.mxu0 0
    %130 = vmatprep.mubr.bf16.mxu0 0
    %131 = vmatmul.mubr.bf16.gmra.mrb[0].mxu0 %v86
    %v132 = vpop.f32.mrb[0].mxu0
    %v133 = vadd.f32 %v59, %v132
    %v134 = vpop.f32.mrb[0].mxu0
    %v135 = vadd.f32 %v63, %v134
    %v136 = vpop.f32.mrb[0].mxu0
    %v137 = vpop.f32.mrb[0].mxu0
    %138 = vdwg.mxu0
    %v139 = vmax.f32 %v133, 0.0
    %v140 = vmax.f32 %v135, 0.0
    %v141 = vpack.c.bf16 %v139, %v139
    %v142 = vpack.c.bf16 %v140, %v140
    %v143 = vld [vmem:[#allocation2] sm:$0xf]
    %v144 = vld [vmem:[#allocation2 + $0x4] sm:$0xf]
    %v145 = vld [vmem:[#allocation2 + $0x8] sm:$0xf]
    %v146 = vld [vmem:[#allocation2 + $0xc] sm:$0xf]
    %v147 = vld [vmem:[#allocation2 + $0x10] sm:$0xf]
    %v148 = vld [vmem:[#allocation2 + $0x14] sm:$0xf]
    %v149 = vld [vmem:[#allocation2 + $0x18] sm:$0xf]
    %v150 = vld [vmem:[#allocation2 + $0x1c] sm:$0xf]
    %v151 = vld [vmem:[#allocation2 + $0x20] sm:$0xf]
    %v152 = vld [vmem:[#allocation2 + $0x24] sm:$0xf]
    %v153 = vld [vmem:[#allocation2 + $0x28] sm:$0xf]
    %v154 = vld [vmem:[#allocation2 + $0x2c] sm:$0xf]
    %v155 = vld [vmem:[#allocation2 + $0x30] sm:$0xf]
    %v156 = vld [vmem:[#allocation2 + $0x34] sm:$0xf]
    %v157 = vld [vmem:[#allocation2 + $0x38] sm:$0xf]
    %v158 = vld [vmem:[#allocation2 + $0x3c] sm:$0xf]
    %v159 = vld [vmem:[#allocation2 + $0x40] sm:$0xf]
    %v160 = vld [vmem:[#allocation2 + $0x44] sm:$0xf]
    %v161 = vld [vmem:[#allocation2 + $0x48] sm:$0xf]
    %v162 = vld [vmem:[#allocation2 + $0x4c] sm:$0xf]
    %v163 = vld [vmem:[#allocation2 + $0x50] sm:$0xf]
    %v164 = vld [vmem:[#allocation2 + $0x54] sm:$0xf]
    %v165 = vld [vmem:[#allocation2 + $0x58] sm:$0xf]
    %v166 = vld [vmem:[#allocation2 + $0x5c] sm:$0xf]
    %v167 = vld [vmem:[#allocation2 + $0x60] sm:$0xf]
    %v168 = vld [vmem:[%s4] sm:$0x1]
    %v170 = vlaneseq
    %v171 = vshrl.u32 %v170, 7
    %v172 = vsub.s32 0, %v171
    %v173 = vrot.slane %v168, %v172
    %v200 = vunpack.c.l.b16 %v143
    %v201 = vunpack.c.l.b16 %v144
    %v202 = vunpack.c.l.b16 %v145
    %v203 = vunpack.c.l.b16 %v146
    %v204 = vunpack.c.l.b16 %v147
    %v205 = vunpack.c.l.b16 %v148
    %v206 = vunpack.c.l.b16 %v149
    %v207 = vunpack.c.l.b16 %v150
    %v208 = vunpack.c.l.b16 %v151
    %v209 = vunpack.c.l.b16 %v152
    %v210 = vunpack.c.l.b16 %v153
    %v211 = vunpack.c.l.b16 %v154
    %v212 = vunpack.c.l.b16 %v155
    %v213 = vunpack.c.l.b16 %v156
    %v214 = vunpack.c.l.b16 %v157
    %v215 = vunpack.c.l.b16 %v158
    %v216 = vunpack.c.l.b16 %v159
    %v217 = vunpack.c.l.b16 %v160
    %v218 = vunpack.c.l.b16 %v161
    %v219 = vunpack.c.l.b16 %v162
    %v220 = vunpack.c.l.b16 %v163
    %v221 = vunpack.c.l.b16 %v164
    %v222 = vunpack.c.l.b16 %v165
    %v223 = vunpack.c.l.b16 %v166
    %v224 = vunpack.c.l.b16 %v167
    %v225 = vpack.c.b16 %v201, %v200
    %v226 = vpack.c.b16 %v203, %v202
    %v227 = vpack.c.b16 %v205, %v204
    %v228 = vpack.c.b16 %v207, %v206
    %v229 = vpack.c.b16 %v209, %v208
    %v230 = vpack.c.b16 %v211, %v210
    %v231 = vpack.c.b16 %v213, %v212
    %v232 = vpack.c.b16 %v215, %v214
    %v233 = vpack.c.b16 %v217, %v216
    %v234 = vpack.c.b16 %v219, %v218
    %v235 = vpack.c.b16 %v221, %v220
    %v236 = vpack.c.b16 %v223, %v222
    %v237 = vpack.c.b16 %v224, %v224
    %vm250 = vcmask 588800
    %v252 = vsel %vm250, %v142, 0
    %v255 = vsel %vm88, %v237, 0
    %257 = vmatprep.subr.bf16.mxu0 0
    %258 = vmatpush1.bf16.msra.mxu0 %v225
    %259 = vmatprep.subr.bf16.mxu0 0
    %260 = vmatpush1.bf16.msra.mxu0 %v226
    %261 = vmatprep.subr.bf16.mxu0 0
    %262 = vmatpush1.bf16.msra.mxu0 %v227
    %263 = vmatprep.subr.bf16.mxu0 0
    %264 = vmatpush1.bf16.msra.mxu0 %v228
    %265 = vmatprep.subr.bf16.mxu0 0
    %266 = vmatpush1.bf16.msra.mxu0 %v229
    %267 = vmatprep.subr.bf16.mxu0 0
    %268 = vmatpush1.bf16.msra.mxu0 %v230
    %269 = vmatprep.subr.bf16.mxu0 0
    %270 = vmatpush1.bf16.msra.mxu0 %v231
    %271 = vmatprep.subr.bf16.mxu0 0
    %272 = vmatpush1.bf16.msra.mxu0 %v232
    %273 = vmatprep.subr.bf16.mxu0 0
    %274 = vmatpush1.bf16.msra.mxu0 %v233
    %275 = vmatprep.subr.bf16.mxu0 0
    %276 = vmatpush1.bf16.msra.mxu0 %v234
    %277 = vmatprep.subr.bf16.mxu0 0
    %278 = vmatpush1.bf16.msra.mxu0 %v235
    %279 = vmatprep.subr.bf16.mxu0 0
    %280 = vmatpush1.bf16.msra.mxu0 %v236
    %281 = vmatprep.subr.bf16.mxu0 0
    %282 = vmatpush1.bf16.msra.mxu0 %v255
    %283 = vmatprep.subr.bf16.mxu0 0
    %284 = vmatpush1.bf16.msra.mxu0 0
    %285 = vmatprep.subr.bf16.mxu0 0
    %286 = vmatpush1.bf16.msra.mxu0 0
    %287 = vmatprep.subr.bf16.mxu0 0
    %288 = vmatpush1.bf16.msra.mxu0 0
    %289 = vmatprep.mubr.bf16.mxu0 %v252
    %290 = vmatmul.mubr.bf16.gmra.mrb[0].mxu0 %v141
    %v291 = vpop.f32.mrb[0].mxu0
    %v292 = vadd.f32 %v173, %v291
    %v293 = vpop.f32.mrb[0].mxu0
    %v294 = vpop.f32.mrb[0].mxu0
    %v295 = vpop.f32.mrb[0].mxu0
    %296 = vdwg.mxu0
    %v297 = vmax.f32 %v292, 0.0
    %v298 = vpack.c.bf16 %v297, %v297
    %v299 = vld [vmem:[%s5] sm:$0xf]
    %v300 = vld [vmem:[%s5 + $0x4] sm:$0xf]
    %v301 = vld [vmem:[%s5 + $0x8] sm:$0xf]
    %v302 = vld [vmem:[%s5 + $0xc] sm:$0xf]
    %v303 = vld [vmem:[%s5 + $0x10] sm:$0xf]
    %v304 = vld [vmem:[%s5 + $0x14] sm:$0xf]
    %v305 = vld [vmem:[%s5 + $0x18] sm:$0xf]
    %v306 = vld [vmem:[%s5 + $0x1c] sm:$0xf]
    %v307 = vld [vmem:[%s5 + $0x20] sm:$0xf]
    %v308 = vld [vmem:[%s5 + $0x24] sm:$0xf]
    %v309 = vld [vmem:[%s5 + $0x28] sm:$0xf]
    %v310 = vld [vmem:[%s5 + $0x2c] sm:$0xf]
    %v311 = vld [vmem:[%s5 + $0x30] sm:$0x3]
    %v312 = vld [vmem:[%s6] sm:$0x1]
    %v314 = vlaneseq
    %v315 = vshrl.u32 %v314, 7
    %v316 = vsub.s32 0, %v315
    %v317 = vrot.slane %v312, %v316
    %v332 = vunpack.c.l.b16 %v299
    %v333 = vunpack.c.l.b16 %v300
    %v334 = vunpack.c.l.b16 %v301
    %v335 = vunpack.c.l.b16 %v302
    %v336 = vunpack.c.l.b16 %v303
    %v337 = vunpack.c.l.b16 %v304
    %v338 = vunpack.c.l.b16 %v305
    %v339 = vunpack.c.l.b16 %v306
    %v340 = vunpack.c.l.b16 %v307
    %v341 = vunpack.c.l.b16 %v308
    %v342 = vunpack.c.l.b16 %v309
    %v343 = vunpack.c.l.b16 %v310
    %v344 = vunpack.c.l.b16 %v311
    %v345 = vpack.c.b16 %v333, %v332
    %v346 = vpack.c.b16 %v335, %v334
    %v347 = vpack.c.b16 %v337, %v336
    %v348 = vpack.c.b16 %v339, %v338
    %v349 = vpack.c.b16 %v341, %v340
    %v350 = vpack.c.b16 %v343, %v342
    %v351 = vpack.c.b16 %v344, %v344
    %vm358 = vcmask 818176
    %v360 = vsel %vm358, %v298, 0
    %vm362 = vcmask 1041408
    %v364 = vsel %vm362, %v351, 0
    %366 = vmatprep.subr.bf16.mxu0 0
    %367 = vmatpush1.bf16.msra.mxu0 %v345
    %368 = vmatprep.subr.bf16.mxu0 0
    %369 = vmatpush1.bf16.msra.mxu0 %v346
    %370 = vmatprep.subr.bf16.mxu0 0
    %371 = vmatpush1.bf16.msra.mxu0 %v347
    %372 = vmatprep.subr.bf16.mxu0 0
    %373 = vmatpush1.bf16.msra.mxu0 %v348
    %374 = vmatprep.subr.bf16.mxu0 0
    %375 = vmatpush1.bf16.msra.mxu0 %v349
    %376 = vmatprep.subr.bf16.mxu0 0
    %377 = vmatpush1.bf16.msra.mxu0 %v350
    %378 = vmatprep.subr.bf16.mxu0 0
    %379 = vmatpush1.bf16.msra.mxu0 %v364
    %380 = vmatprep.subr.bf16.mxu0 0
    %381 = vmatpush1.bf16.msra.mxu0 0
    %382 = vmatprep.subr.bf16.mxu0 0
    %383 = vmatpush1.bf16.msra.mxu0 0
    %384 = vmatprep.subr.bf16.mxu0 0
    %385 = vmatpush1.bf16.msra.mxu0 0
    %386 = vmatprep.subr.bf16.mxu0 0
    %387 = vmatpush1.bf16.msra.mxu0 0
    %388 = vmatprep.subr.bf16.mxu0 0
    %389 = vmatpush1.bf16.msra.mxu0 0
    %390 = vmatprep.subr.bf16.mxu0 0
    %391 = vmatpush1.bf16.msra.mxu0 0
    %392 = vmatprep.subr.bf16.mxu0 0
    %393 = vmatpush1.bf16.msra.mxu0 0
    %394 = vmatprep.subr.bf16.mxu0 0
    %395 = vmatpush1.bf16.msra.mxu0 0
    %396 = vmatprep.subr.bf16.mxu0 0
    %397 = vmatpush1.bf16.msra.mxu0 0
    %398 = vmatprep.mubr.bf16.mxu0 0
    %399 = vmatmul.mubr.bf16.gmra.mrb[0].mxu0 %v360
    %v400 = vpop.f32.mrb[0].mxu0
    %v401 = vadd.f32 %v317, %v400
    %v402 = vpop.f32.mrb[0].mxu0
    %v403 = vpop.f32.mrb[0].mxu0
    %v404 = vpop.f32.mrb[0].mxu0
    %405 = vdwg.mxu0
    %v406 = vmax.f32 %v401, 0.0
    %v407 = vpack.c.bf16 %v406, %v406
    %v408 = vld [vmem:[%s7] sm:$0xf]
    %v409 = vld [vmem:[%s7 + $0x4] sm:$0xf]
    %v410 = vld [vmem:[%s7 + $0x8] sm:$0xf]
    %v411 = vld [vmem:[%s7 + $0xc] sm:$0xf]
    %v412 = vld [vmem:[%s7 + $0x10] sm:$0xf]
    %v413 = vld [vmem:[%s7 + $0x14] sm:$0xf]
    %v414 = vld [vmem:[%s7 + $0x18] sm:$0x1]
    %v415 = vld [vmem:[%s8] sm:$0x1]
    %v417 = vlaneseq
    %v418 = vshrl.u32 %v417, 7
    %v419 = vsub.s32 0, %v418
    %v420 = vrot.slane %v415, %v419
    %v429 = vunpack.c.l.b16 %v408
    %v430 = vunpack.c.l.b16 %v409
    %v431 = vunpack.c.l.b16 %v410
    %v432 = vunpack.c.l.b16 %v411
    %v433 = vunpack.c.l.b16 %v412
    %v434 = vunpack.c.l.b16 %v413
    %v435 = vunpack.c.l.b16 %v414
    %v436 = vpack.c.b16 %v430, %v429
    %v437 = vpack.c.b16 %v432, %v431
    %v438 = vpack.c.b16 %v434, %v433
    %v439 = vpack.c.b16 %v435, %v435
    %vm443 = vcmask 408576
    %v445 = vsel %vm443, %v407, 0
    %vm447 = vcmask 1040384
    %v449 = vsel %vm447, %v439, 0
    %451 = vmatprep.subr.bf16.mxu0 0
    %452 = vmatpush1.bf16.msra.mxu0 %v436
    %453 = vmatprep.subr.bf16.mxu0 0
    %454 = vmatpush1.bf16.msra.mxu0 %v437
    %455 = vmatprep.subr.bf16.mxu0 0
    %456 = vmatpush1.bf16.msra.mxu0 %v438
    %457 = vmatprep.subr.bf16.mxu0 0
    %458 = vmatpush1.bf16.msra.mxu0 %v449
    %459 = vmatprep.subr.bf16.mxu0 0
    %460 = vmatpush1.bf16.msra.mxu0 0
    %461 = vmatprep.subr.bf16.mxu0 0
    %462 = vmatpush1.bf16.msra.mxu0 0
    %463 = vmatprep.subr.bf16.mxu0 0
    %464 = vmatpush1.bf16.msra.mxu0 0
    %465 = vmatprep.subr.bf16.mxu0 0
    %466 = vmatpush1.bf16.msra.mxu0 0
    %467 = vmatprep.subr.bf16.mxu0 0
    %468 = vmatpush1.bf16.msra.mxu0 0
    %469 = vmatprep.subr.bf16.mxu0 0
    %470 = vmatpush1.bf16.msra.mxu0 0
    %471 = vmatprep.subr.bf16.mxu0 0
    %472 = vmatpush1.bf16.msra.mxu0 0
    %473 = vmatprep.subr.bf16.mxu0 0
    %474 = vmatpush1.bf16.msra.mxu0 0
    %475 = vmatprep.subr.bf16.mxu0 0
    %476 = vmatpush1.bf16.msra.mxu0 0
    %477 = vmatprep.subr.bf16.mxu0 0
    %478 = vmatpush1.bf16.msra.mxu0 0
    %479 = vmatprep.subr.bf16.mxu0 0
    %480 = vmatpush1.bf16.msra.mxu0 0
    %481 = vmatprep.subr.bf16.mxu0 0
    %482 = vmatpush1.bf16.msra.mxu0 0
    %483 = vmatprep.mubr.bf16.mxu0 0
    %484 = vmatmul.mubr.bf16.gmra.mrb[0].mxu0 %v445
    %v485 = vpop.f32.mrb[0].mxu0
    %v486 = vadd.f32 %v420, %v485
    %v487 = vpop.f32.mrb[0].mxu0
    %v488 = vpop.f32.mrb[0].mxu0
    %v489 = vpop.f32.mrb[0].mxu0
    %490 = vdwg.mxu0
    %491 = vst [vmem:[#allocation5] sm:$0xff] %v486
    // Predicated region
    $region42: #{tpu_custom_call.1} parent=1 // pred_check
      _
    $region43: #{tpu_custom_call.1} parent=1 // pred_check_branch
      %493 = sbr.rel (0) target = $region45
    $region44: #{tpu_custom_call.1} parent=1 // pred_region
      %s495 = ssub.s32 128, 128
      %496 = vsyncadd [#allocation4], %s495
      %s498 = sshll.u32 [#allocation5], 4
      %s499 = int_to_ptr.vmem [resolvable:$true] %s498
      %501 = dma.vmem_to_hbm [thread:$0]  %s499, 128, %s9, [#allocation4]
    $region45: #{tpu_custom_call.1} parent=1 // pred_fallthru
      _
    // Predicated region
    $region46: #{tpu_custom_call.1} parent=1 // pred_check
      _
    $region47: #{tpu_custom_call.1} parent=1 // pred_check_branch
      %503 = sbr.rel (0) target = $region49
    $region48: #{tpu_custom_call.1} parent=1 // pred_region
      %504 = dma.done [#allocation4], 128
    $region49: #{tpu_custom_call.1} parent=1 // pred_fallthru
      _
    %505 = vsyncpa [#allocation3], 1
    %506 = vsyncpa [#allocation4], 1

</llo_original>
